<compile_context>
chip_gen: v7x
topology: tpu7x:2x2x1
jax: 0.10.0
libtpu: 0.0.40
codegen_flags: <defaults>
</compile_context>

<pallas_src>
import jax
import jax.numpy as jnp
from jax import lax
from jax.experimental import pallas as pl
from jax.experimental.pallas import tpu as pltpu


def diffpool_kernel(x_ref, adj_ref, wp_ref, we_ref,
                    out_ref, out_adj_ref, scal_ref):
    bt = x_ref.shape[0]          # graphs processed per grid step
    c = wp_ref.shape[1]          # number of clusters

    # Loop invariants hoisted (broadcast/iota are not CSE'd inside the loop).
    wp = wp_ref[...]             # (Fin, C)    f32
    we = we_ref[...]             # (Fin, Fout) f32
    eye_c = (lax.broadcasted_iota(jnp.int32, (c, c), 0)
             == lax.broadcasted_iota(jnp.int32, (c, c), 1)).astype(jnp.float32)
    lane2 = lax.broadcasted_iota(jnp.int32, (1, 2), 1)
    dn_t = (((0,), (0,)), ((), ()))   # contract over axis 0 of both == lhs^T @ rhs

    def per_graph(i, carry):
        x = x_ref[i]                  # (N, Fin)  f32
        adj = adj_ref[i]              # (N, N)    f32 or bf16

        # --- DenseGCN shared propagation; Laplacian never materialized -------
        # deg = rowsum(A + I) = rowsum(A) + 1  (>= 1, so rsqrt is safe)
        deg = jnp.sum(adj, axis=1, keepdims=True, dtype=jnp.float32) + 1.0
        d = lax.rsqrt(deg)                                        # (N, 1)
        xd = x * d                                                # D^{-1/2} x
        axd = jnp.dot(adj, xd.astype(adj.dtype),
                      preferred_element_type=jnp.float32)         # (N, Fin)
        xl = d * (axd + xd)

        # --- gnn_pool / gnn_embed (ReLU GCN heads; 2nd ReLU is idempotent) ----
        s_pre = jnp.maximum(
            jnp.dot(xl, wp, preferred_element_type=jnp.float32), 0.0)   # (N, C)
        x_emb = jnp.maximum(
            jnp.dot(xl, we, preferred_element_type=jnp.float32), 0.0)   # (N, Fout)

        # --- softmax over clusters (approx reciprocal -> EUP slot) ------------
        m = jnp.max(s_pre, axis=-1, keepdims=True)
        e = jnp.exp(s_pre - m)
        z = jnp.sum(e, axis=-1, keepdims=True)
        s = e * pl.reciprocal(z, approx=True)                     # (N, C)

        # --- dense_diff_pool: transposed-LHS contractions, no jnp.transpose ---
        out = lax.dot_general(s, x_emb, dn_t,
                              preferred_element_type=jnp.float32)     # (C, Fout)
        sa = lax.dot_general(s.astype(adj.dtype), adj, dn_t,
                             preferred_element_type=jnp.float32)      # (C, N)
        oadj = jnp.dot(sa, s, preferred_element_type=jnp.float32)     # (C, C)
        out_ref[i] = out.astype(out_ref.dtype)
        out_adj_ref[i] = oadj.astype(out_adj_ref.dtype)

        # --- regularizer partials (no (N,N) S S^T temporary) ------------------
        # ||A - S S^T||^2 = ||A||^2 - 2 tr(S^T A S) + ||S^T S||^2
        gram = lax.dot_general(s, s, dn_t,
                               preferred_element_type=jnp.float32)    # (C, C)
        cross = jnp.sum(oadj * eye_c)                                 # tr(S^T A S)
        adj_f = adj.astype(jnp.float32)
        sq_i = jnp.sum(adj_f * adj_f) - 2.0 * cross + jnp.sum(gram * gram)
        # entropy via LSE identity: log s = (s_pre - m) - log z; rows of s sum to 1
        ent_i = jnp.sum(jnp.log(z)) - jnp.sum(s * (s_pre - m))
        scal_ref[i] = jnp.where(lane2 == 0, sq_i, ent_i)              # (1, 2)
        return carry

    lax.fori_loop(0, bt, per_graph, 0)


def _vmem_budget_bytes():
    """Scoped-VMEM budget with headroom: 75% of physical, capped at 96 MiB.

    v7x (64 MiB physical) -> 48 MiB; v5e/v6e (128 MiB) -> 96 MiB.
    """
    cap = 128 * 2 ** 20
    try:
        cap = int(pltpu.get_tpu_info().vmem_capacity_bytes)
    except Exception:
        pass
    return int(min(cap * 3 // 4, 96 * 2 ** 20))


def _pick_bt(b, n, adj_itemsize, adj_budget_bytes, max_bt=8):
    """Largest divisor of b (<= max_bt) whose double-buffered adj block fits.

    Also keeps the grid at >= 2 steps when b >= 2: v7x has 2 TensorCores and
    the single 'parallel' batch axis is the only thing that can shard across
    them (v5e/v6e are unaffected by this cap)."""
    best = 1
    for cand in range(1, min(b, max_bt) + 1):
        if b % cand:
            continue
        if b >= 2 and b // cand < 2:
            continue
        if 2 * adj_itemsize * cand * n * n <= adj_budget_bytes:
            best = cand
    return best


def diffpool(x, adj, w_pool, w_emb, *, adj_dtype=jnp.bfloat16):
    """DIFFPOOL forward.  adj_dtype=bf16 (default) halves the dominant HBM
    read (the kernel is memory-bound on the (B,N,N) adjacency); pass
    jnp.float32 for reference-accurate numerics."""
    B, N, Fin = x.shape
    C = w_pool.shape[1]
    Fout = w_emb.shape[1]

    budget = _vmem_budget_bytes()
    itemsize = jnp.dtype(adj_dtype).itemsize
    bt = _pick_bt(B, N, itemsize, adj_budget_bytes=budget // 2)
    g = B // bt

    # Per-step block bytes (single buffer); the pipeline double-buffers them.
    blk_bytes = (4 * bt * N * Fin + itemsize * bt * N * N
                 + 4 * Fin * (C + Fout)
                 + 4 * bt * (C * Fout + C * C + 2))
    vmem_limit = int(min(max(3 * blk_bytes, 16 * 2 ** 20), budget))

    x = x.astype(jnp.float32)
    adj = adj.astype(adj_dtype)       # narrow in HBM: halves the adj DMA for bf16
    # TODO(synk): binary adjacencies could use fp8 (v7x) / int8 (v5e/v6e) to
    #             quarter the dominant read; not valid for weighted graphs.
    # TODO(synk): for N >~ 2048, add a second "arbitrary" grid axis that tiles
    #             adj rows with a VMEM accumulator instead of one (bt,N,N) block.
    # TODO(synk): small-graph regime (N, C, Fout << 128) would benefit from
    #             packing several graphs along the lane axis (block-diag adj).

    out, out_adj, parts = pl.pallas_call(
        diffpool_kernel,
        out_shape=(
            jax.ShapeDtypeStruct((B, C, Fout), jnp.float32),
            jax.ShapeDtypeStruct((B, C, C), jnp.float32),
            jax.ShapeDtypeStruct((B, 1, 2), jnp.float32),   # per-graph (sq, ent)
        ),
        grid_spec=pltpu.PrefetchScalarGridSpec(
            num_scalar_prefetch=0,
            grid=(g,),
            in_specs=[
                pl.BlockSpec((bt, N, Fin), lambda i: (i, 0, 0)),
                pl.BlockSpec((bt, N, N), lambda i: (i, 0, 0)),
                pl.BlockSpec((Fin, C), lambda i: (0, 0)),
                pl.BlockSpec((Fin, Fout), lambda i: (0, 0)),
            ],
            out_specs=[
                pl.BlockSpec((bt, C, Fout), lambda i: (i, 0, 0)),
                pl.BlockSpec((bt, C, C), lambda i: (i, 0, 0)),
                pl.BlockSpec((bt, 1, 2), lambda i: (i, 0, 0)),
            ],
        ),
        compiler_params=pltpu.CompilerParams(
            dimension_semantics=("parallel",),
            vmem_limit_bytes=vmem_limit,
        ),
    )(x, adj, w_pool.astype(jnp.float32), w_emb.astype(jnp.float32))

    sq = jnp.sum(parts[:, 0, 0])
    ent = jnp.sum(parts[:, 0, 1])
    reg = jnp.sqrt(jnp.maximum(sq, 0.0)) / float(B * N * N) + ent / float(B)
    return out, out_adj, reg


def diffpool_ref(x, adj, w_pool, w_emb):
    """Pure-JAX reference mirroring the PyTorch module."""
    B, N, _ = x.shape
    adj_hat = adj + jnp.eye(N, dtype=x.dtype)[None]
    d = 1.0 / jnp.sqrt(jnp.sum(adj_hat, axis=2))
    lap = d[:, None, :] * adj_hat * d[:, :, None]
    xl = jnp.matmul(lap, x)
    s = jax.nn.relu(jnp.matmul(xl, w_pool))
    xe = jax.nn.relu(jnp.matmul(xl, w_emb))
    s = jax.nn.softmax(s, axis=-1)
    s_t = jnp.swapaxes(s, 1, 2)
    out = jnp.matmul(s_t, xe)
    out_adj = jnp.matmul(jnp.matmul(s_t, adj), s)
    reg = jnp.sqrt(jnp.sum((adj - jnp.matmul(s, s_t)) ** 2)) / adj.size
    ent = -jnp.sum(s * jnp.log(s + 1e-14)) / B
    return out, out_adj, reg + ent


if __name__ == "__main__":
    B, N, Fin, Fout, C = 2, 16, 8, 32, 8   # C == DIFFPOOL's `num_nodes` (clusters)

    key = jax.random.PRNGKey(0)
    kx, ka, kwp, kwe = jax.random.split(key, 4)
    x = jax.random.normal(kx, (B, N, Fin), dtype=jnp.float32)
    # non-negative adjacency so degrees are positive (as a graph would be)
    adj = jax.random.uniform(ka, (B, N, N), dtype=jnp.float32)
    w_pool = jax.random.normal(kwp, (Fin, C), dtype=jnp.float32)    # gnn_pool.W
    w_emb = jax.random.normal(kwe, (Fin, Fout), dtype=jnp.float32)  # gnn_embed.W

    r_out, r_adj, r_reg = diffpool_ref(x, adj, w_pool, w_emb)

    # Reference-accurate path: adjacency kept in f32.
    out, out_adj, reg = diffpool(x, adj, w_pool, w_emb, adj_dtype=jnp.float32)
    jax.block_until_ready((out, out_adj, reg))
    assert jnp.allclose(out, r_out, rtol=2e-3, atol=2e-3)
    assert jnp.allclose(out_adj, r_adj, rtol=2e-3, atol=2e-3)
    assert jnp.allclose(reg, r_reg, rtol=2e-3, atol=2e-3)

    # Default fast path: adjacency streamed as bf16 (bf16-appropriate tolerance).
    out_b, out_adj_b, reg_b = diffpool(x, adj, w_pool, w_emb)
    jax.block_until_ready((out_b, out_adj_b, reg_b))
    assert jnp.allclose(out_b, r_out, rtol=2e-2, atol=2e-2)
    assert jnp.allclose(out_adj_b, r_adj, rtol=2e-2, atol=2e-2)
    assert jnp.allclose(reg_b, r_reg, rtol=2e-2, atol=2e-2)

    print("KERNEL_OK")
</pallas_src>

<mosaic_0001>
module attributes {stable_mosaic.version = 11 : i64} {
  func.func @diffpool_kernel(%arg0: i32, %arg1: memref<1x16x8xf32, #tpu.memory_space<vmem>>, %arg2: memref<1x16x16xf32, #tpu.memory_space<vmem>>, %arg3: memref<8x8xf32, #tpu.memory_space<vmem>>, %arg4: memref<8x32xf32, #tpu.memory_space<vmem>>, %arg5: memref<1x8x32xf32, #tpu.memory_space<vmem>>, %arg6: memref<1x8x8xf32, #tpu.memory_space<vmem>>, %arg7: memref<1x1x2xf32, #tpu.memory_space<vmem>>) attributes {dimension_semantics = [#tpu.dimension_semantics<parallel>], iteration_bounds = array<i64: 2>, scalar_prefetch = 0 : i64, scratch_operands = 0 : i64, tpu.core_type = #tpu.core_type<tc>, window_params = [{transform_indices = @transform_0, window_bounds = array<i64: 1, 16, 8>}, {transform_indices = @transform_1, window_bounds = array<i64: 1, 16, 16>}, {pipeline_mode = #tpu.pipeline_mode<synchronous>, transform_indices = @transform_2, window_bounds = array<i64: 8, 8>}, {pipeline_mode = #tpu.pipeline_mode<synchronous>, transform_indices = @transform_3, window_bounds = array<i64: 8, 32>}, {transform_indices = @transform_4, window_bounds = array<i64: 1, 8, 32>}, {transform_indices = @transform_5, window_bounds = array<i64: 1, 8, 8>}, {transform_indices = @transform_6, window_bounds = array<i64: 1, 1, 2>}]} {
    %c0 = arith.constant 0 : index
    %c0_0 = arith.constant 0 : index
    %0 = vector.load %arg3[%c0, %c0_0] : memref<8x8xf32, #tpu.memory_space<vmem>>, vector<8x8xf32>
    %c0_1 = arith.constant 0 : index
    %c0_2 = arith.constant 0 : index
    %1 = vector.load %arg4[%c0_1, %c0_2] : memref<8x32xf32, #tpu.memory_space<vmem>>, vector<8x32xf32>
    %2 = tpu.iota {dimensions = array<i32: 0>} : vector<8x8xi32>
    %3 = tpu.iota {dimensions = array<i32: 1>} : vector<8x8xi32>
    %4 = arith.cmpi eq, %2, %3 : vector<8x8xi32>
    %5 = arith.extui %4 : vector<8x8xi1> to vector<8x8xi32>
    %6 = arith.sitofp %5 : vector<8x8xi32> to vector<8x8xf32>
    %7 = tpu.iota {dimensions = array<i32: 1>} : vector<1x2xi32>
    %c0_i32 = arith.constant 0 : i32
    %8 = arith.index_cast %c0_i32 : i32 to index
    %c0_3 = arith.constant 0 : index
    %c0_4 = arith.constant 0 : index
    %9 = vector.load %arg1[%8, %c0_3, %c0_4] : memref<1x16x8xf32, #tpu.memory_space<vmem>>, vector<1x16x8xf32>
    %10 = vector.shape_cast %9 : vector<1x16x8xf32> to vector<16x8xf32>
    %11 = arith.index_cast %c0_i32 : i32 to index
    %c0_5 = arith.constant 0 : index
    %c0_6 = arith.constant 0 : index
    %12 = vector.load %arg2[%11, %c0_5, %c0_6] : memref<1x16x16xf32, #tpu.memory_space<vmem>>, vector<1x16x16xf32>
    %13 = vector.shape_cast %12 : vector<1x16x16xf32> to vector<16x16xf32>
    %cst = arith.constant dense<0.000000e+00> : vector<16xf32>
    %14 = vector.multi_reduction <add>, %13, %cst [1] : vector<16x16xf32> to vector<16xf32>
    %15 = vector.shape_cast %14 : vector<16xf32> to vector<16x1xf32>
    %cst_7 = arith.constant 1.000000e+00 : f32
    %16 = vector.broadcast %cst_7 : f32 to vector<16x1xf32>
    %17 = arith.addf %15, %16 : vector<16x1xf32>
    %18 = math.rsqrt %17 : vector<16x1xf32>
    %19 = vector.broadcast %18 : vector<16x1xf32> to vector<16x8xf32>
    %20 = arith.mulf %10, %19 : vector<16x8xf32>
    %cst_8 = arith.constant dense<0.000000e+00> : vector<16x8xf32>
    %21 = tpu.matmul %13, %20, %cst_8 {dimension_numbers = #tpu.dot_dimension_numbers<[1], [0], [0], [1], [0, 0, 1, 1], [], []>} : vector<16x16xf32>, vector<16x8xf32>, vector<16x8xf32> -> vector<16x8xf32>
    %22 = arith.addf %21, %20 : vector<16x8xf32>
    %23 = vector.broadcast %18 : vector<16x1xf32> to vector<16x8xf32>
    %24 = arith.mulf %23, %22 : vector<16x8xf32>
    %cst_9 = arith.constant dense<0.000000e+00> : vector<16x8xf32>
    %25 = tpu.matmul %24, %0, %cst_9 {dimension_numbers = #tpu.dot_dimension_numbers<[1], [0], [0], [1], [0, 0, 1, 1], [], []>} : vector<16x8xf32>, vector<8x8xf32>, vector<16x8xf32> -> vector<16x8xf32>
    %cst_10 = arith.constant 0.000000e+00 : f32
    %26 = vector.broadcast %cst_10 : f32 to vector<16x8xf32>
    %27 = arith.maximumf %25, %26 : vector<16x8xf32>
    %cst_11 = arith.constant dense<0.000000e+00> : vector<16x32xf32>
    %28 = tpu.matmul %24, %1, %cst_11 {dimension_numbers = #tpu.dot_dimension_numbers<[1], [0], [0], [1], [0, 0, 1, 1], [], []>} : vector<16x8xf32>, vector<8x32xf32>, vector<16x32xf32> -> vector<16x32xf32>
    %cst_12 = arith.constant 0.000000e+00 : f32
    %29 = vector.broadcast %cst_12 : f32 to vector<16x32xf32>
    %30 = arith.maximumf %28, %29 : vector<16x32xf32>
    %cst_13 = arith.constant dense<0xFF800000> : vector<16xf32>
    %31 = vector.multi_reduction <maximumf>, %27, %cst_13 [1] : vector<16x8xf32> to vector<16xf32>
    %32 = vector.shape_cast %31 : vector<16xf32> to vector<16x1xf32>
    %33 = vector.broadcast %32 : vector<16x1xf32> to vector<16x8xf32>
    %34 = arith.subf %27, %33 : vector<16x8xf32>
    %35 = math.exp %34 : vector<16x8xf32>
    %cst_14 = arith.constant dense<0.000000e+00> : vector<16xf32>
    %36 = vector.multi_reduction <add>, %35, %cst_14 [1] : vector<16x8xf32> to vector<16xf32>
    %37 = vector.shape_cast %36 : vector<16xf32> to vector<16x1xf32>
    %38 = tpu.reciprocal %37 {approx = true} : vector<16x1xf32> -> vector<16x1xf32>
    %39 = vector.broadcast %38 : vector<16x1xf32> to vector<16x8xf32>
    %40 = arith.mulf %35, %39 : vector<16x8xf32>
    %cst_15 = arith.constant dense<0.000000e+00> : vector<8x32xf32>
    %41 = tpu.matmul %40, %30, %cst_15 {dimension_numbers = #tpu.dot_dimension_numbers<[0], [0], [1], [1], [0, 1, 1, 1], [], []>} : vector<16x8xf32>, vector<16x32xf32>, vector<8x32xf32> -> vector<8x32xf32>
    %cst_16 = arith.constant dense<0.000000e+00> : vector<8x16xf32>
    %42 = tpu.matmul %40, %13, %cst_16 {dimension_numbers = #tpu.dot_dimension_numbers<[0], [0], [1], [1], [0, 1, 1, 1], [], []>} : vector<16x8xf32>, vector<16x16xf32>, vector<8x16xf32> -> vector<8x16xf32>
    %cst_17 = arith.constant dense<0.000000e+00> : vector<8x8xf32>
    %43 = tpu.matmul %42, %40, %cst_17 {dimension_numbers = #tpu.dot_dimension_numbers<[1], [0], [0], [1], [0, 0, 1, 1], [], []>} : vector<8x16xf32>, vector<16x8xf32>, vector<8x8xf32> -> vector<8x8xf32>
    %44 = arith.index_cast %c0_i32 : i32 to index
    %c0_18 = arith.constant 0 : index
    %c0_19 = arith.constant 0 : index
    %45 = vector.load %arg5[%44, %c0_18, %c0_19] : memref<1x8x32xf32, #tpu.memory_space<vmem>>, vector<1x8x32xf32>
    %46 = vector.shape_cast %45 : vector<1x8x32xf32> to vector<8x32xf32>
    %47 = vector.shape_cast %41 : vector<8x32xf32> to vector<1x8x32xf32>
    tpu.vector_store %arg5[%44, %c0_18, %c0_19], %47 {strides = array<i32>} : memref<1x8x32xf32, #tpu.memory_space<vmem>>, vector<1x8x32xf32>,
    %48 = arith.index_cast %c0_i32 : i32 to index
    %c0_20 = arith.constant 0 : index
    %c0_21 = arith.constant 0 : index
    %49 = vector.load %arg6[%48, %c0_20, %c0_21] : memref<1x8x8xf32, #tpu.memory_space<vmem>>, vector<1x8x8xf32>
    %50 = vector.shape_cast %49 : vector<1x8x8xf32> to vector<8x8xf32>
    %51 = vector.shape_cast %43 : vector<8x8xf32> to vector<1x8x8xf32>
    tpu.vector_store %arg6[%48, %c0_20, %c0_21], %51 {strides = array<i32>} : memref<1x8x8xf32, #tpu.memory_space<vmem>>, vector<1x8x8xf32>,
    %cst_22 = arith.constant dense<0.000000e+00> : vector<8x8xf32>
    %52 = tpu.matmul %40, %40, %cst_22 {dimension_numbers = #tpu.dot_dimension_numbers<[0], [0], [1], [1], [0, 1, 1, 1], [], []>} : vector<16x8xf32>, vector<16x8xf32>, vector<8x8xf32> -> vector<8x8xf32>
    %53 = arith.mulf %43, %6 : vector<8x8xf32>
    %54 = vector.shape_cast %53 : vector<8x8xf32> to vector<1x8x8xf32>
    %cst_23 = arith.constant dense<0.000000e+00> : vector<1xf32>
    %55 = vector.multi_reduction <add>, %54, %cst_23 [1, 2] : vector<1x8x8xf32> to vector<1xf32>
    %56 = vector.shape_cast %55 : vector<1xf32> to vector<1x1x1xf32>
    %57 = vector.extract %56[0, 0, 0] : f32 from vector<1x1x1xf32>
    %58 = arith.mulf %13, %13 : vector<16x16xf32>
    %59 = vector.shape_cast %58 : vector<16x16xf32> to vector<1x16x16xf32>
    %cst_24 = arith.constant dense<0.000000e+00> : vector<1xf32>
    %60 = vector.multi_reduction <add>, %59, %cst_24 [1, 2] : vector<1x16x16xf32> to vector<1xf32>
    %61 = vector.shape_cast %60 : vector<1xf32> to vector<1x1x1xf32>
    %62 = vector.extract %61[0, 0, 0] : f32 from vector<1x1x1xf32>
    %cst_25 = arith.constant 2.000000e+00 : f32
    %63 = arith.mulf %cst_25, %57 : f32
    %64 = arith.subf %62, %63 : f32
    %65 = arith.mulf %52, %52 : vector<8x8xf32>
    %66 = vector.shape_cast %65 : vector<8x8xf32> to vector<1x8x8xf32>
    %cst_26 = arith.constant dense<0.000000e+00> : vector<1xf32>
    %67 = vector.multi_reduction <add>, %66, %cst_26 [1, 2] : vector<1x8x8xf32> to vector<1xf32>
    %68 = vector.shape_cast %67 : vector<1xf32> to vector<1x1x1xf32>
    %69 = vector.extract %68[0, 0, 0] : f32 from vector<1x1x1xf32>
    %70 = arith.addf %64, %69 : f32
    %71 = math.log %37 : vector<16x1xf32>
    %72 = vector.shape_cast %71 : vector<16x1xf32> to vector<1x16x1xf32>
    %cst_27 = arith.constant dense<0.000000e+00> : vector<1xf32>
    %73 = vector.multi_reduction <add>, %72, %cst_27 [1, 2] : vector<1x16x1xf32> to vector<1xf32>
    %74 = vector.shape_cast %73 : vector<1xf32> to vector<1x1x1xf32>
    %75 = vector.extract %74[0, 0, 0] : f32 from vector<1x1x1xf32>
    %76 = vector.broadcast %32 : vector<16x1xf32> to vector<16x8xf32>
    %77 = arith.subf %27, %76 : vector<16x8xf32>
    %78 = arith.mulf %40, %77 : vector<16x8xf32>
    %79 = vector.shape_cast %78 : vector<16x8xf32> to vector<1x16x8xf32>
    %cst_28 = arith.constant dense<0.000000e+00> : vector<1xf32>
    %80 = vector.multi_reduction <add>, %79, %cst_28 [1, 2] : vector<1x16x8xf32> to vector<1xf32>
    %81 = vector.shape_cast %80 : vector<1xf32> to vector<1x1x1xf32>
    %82 = vector.extract %81[0, 0, 0] : f32 from vector<1x1x1xf32>
    %83 = arith.subf %75, %82 : f32
    %c0_i32_29 = arith.constant 0 : i32
    %84 = vector.broadcast %c0_i32_29 : i32 to vector<1x2xi32>
    %85 = arith.cmpi eq, %7, %84 : vector<1x2xi32>
    %86 = vector.broadcast %70 : f32 to vector<1x2xf32>
    %87 = vector.broadcast %83 : f32 to vector<1x2xf32>
    %88 = arith.select %85, %86, %87 : vector<1x2xi1>, vector<1x2xf32>
    %89 = arith.index_cast %c0_i32 : i32 to index
    %c0_30 = arith.constant 0 : index
    %c0_31 = arith.constant 0 : index
    %90 = vector.load %arg7[%89, %c0_30, %c0_31] : memref<1x1x2xf32, #tpu.memory_space<vmem>>, vector<1x1x2xf32>
    %91 = vector.shape_cast %90 : vector<1x1x2xf32> to vector<1x2xf32>
    %92 = vector.shape_cast %88 : vector<1x2xf32> to vector<1x1x2xf32>
    tpu.vector_store %arg7[%89, %c0_30, %c0_31], %92 {strides = array<i32>} : memref<1x1x2xf32, #tpu.memory_space<vmem>>, vector<1x1x2xf32>,
    %c1_i32 = arith.constant 1 : i32
    return
  }
  func.func @transform_0(%arg0: i32) -> (i32, i32, i32) {
    %c0_i32 = arith.constant 0 : i32
    %c0_i32_0 = arith.constant 0 : i32
    %c0_i32_1 = arith.constant 0 : i32
    return %arg0, %c0_i32, %c0_i32_0 : i32, i32, i32
  }
  func.func @transform_1(%arg0: i32) -> (i32, i32, i32) {
    %c0_i32 = arith.constant 0 : i32
    %c0_i32_0 = arith.constant 0 : i32
    %c0_i32_1 = arith.constant 0 : i32
    return %arg0, %c0_i32, %c0_i32_0 : i32, i32, i32
  }
  func.func @transform_2(%arg0: i32) -> (i32, i32) {
    %c0_i32 = arith.constant 0 : i32
    %c0_i32_0 = arith.constant 0 : i32
    %c0_i32_1 = arith.constant 0 : i32
    return %c0_i32, %c0_i32_0 : i32, i32
  }
  func.func @transform_3(%arg0: i32) -> (i32, i32) {
    %c0_i32 = arith.constant 0 : i32
    %c0_i32_0 = arith.constant 0 : i32
    %c0_i32_1 = arith.constant 0 : i32
    return %c0_i32, %c0_i32_0 : i32, i32
  }
  func.func @transform_4(%arg0: i32) -> (i32, i32, i32) {
    %c0_i32 = arith.constant 0 : i32
    %c0_i32_0 = arith.constant 0 : i32
    %c0_i32_1 = arith.constant 0 : i32
    return %arg0, %c0_i32, %c0_i32_0 : i32, i32, i32
  }
  func.func @transform_5(%arg0: i32) -> (i32, i32, i32) {
    %c0_i32 = arith.constant 0 : i32
    %c0_i32_0 = arith.constant 0 : i32
    %c0_i32_1 = arith.constant 0 : i32
    return %arg0, %c0_i32, %c0_i32_0 : i32, i32, i32
  }
  func.func @transform_6(%arg0: i32) -> (i32, i32, i32) {
    %c0_i32 = arith.constant 0 : i32
    %c0_i32_0 = arith.constant 0 : i32
    %c0_i32_1 = arith.constant 0 : i32
    return %arg0, %c0_i32, %c0_i32_0 : i32, i32, i32
  }
}

</mosaic_0001>

<llo_original>
// kernel: tpu_custom_call.1
$region0: #{tpu_custom_call.1}
  #allocation0 [shape = 'u32[]', space=smem, size = 0x4, offset = 0x4, fixed_abs, tag = 'smem constant byte address 0x4 - core index']
  #allocation1 [shape = 'u32[144,128]{1,0:T(1,128)}', space=vmem, size = 0x12000, scoped, tag = 'internal scratch']
  %s0 = inlined_call_operand.vmem [shape: f32[2,16,8], index: 0, kind: input, shape index: {}]
  %s1 = inlined_call_operand.vmem [shape: f32[2,16,16], index: 1, kind: input, shape index: {}]
  %s2 = inlined_call_operand.vmem [shape: f32[8,8], index: 2, kind: input, shape index: {}]
  %s3 = inlined_call_operand.vmem [shape: f32[8,32], index: 3, kind: input, shape index: {}]
  %s4 = inlined_call_operand.hbm [shape: f32[2,8,32], index: 4, kind: output, shape index: {0}]
  %s5 = inlined_call_operand.hbm [shape: f32[2,8,8], index: 5, kind: output, shape index: {1}]
  %s6 = inlined_call_operand.hbm [shape: f32[2,1,2], index: 6, kind: output, shape index: {2}]
  %7 = xla_tuple %s4, %s5, %s6
  %s8 = sld [smem:[#allocation0]]
  $region65: #{tpu_custom_call.1} parent=0
    _
  %s10 = ssub.s32 1, %s8
  %s11 = scalar_select 0, %s10, %s8
  $region1: #{tpu_custom_call.1} parent=0
    #allocation2 [shape = 'u8[8192]{0}', space=vmem, size = 0x2000, scoped, tag = 'output window, operand 0']
    #allocation3 [shape = 's32[2]{0}', space=sflag, size = 0x8, scoped, tag = 'scoped memory for tpu_custom_call.1']
    #allocation4 [shape = 'u8[8192]{0}', space=vmem, size = 0x2000, scoped, tag = 'output window, operand 1']
    #allocation5 [shape = 's32[2]{0}', space=sflag, size = 0x8, scoped, tag = 'scoped memory for tpu_custom_call.1']
    #allocation6 [shape = 'u8[1024]{0}', space=vmem, size = 0x400, scoped, tag = 'output window, operand 2']
    %12 = vsyncpa [#allocation3], 0
    %s13 = scalar_lea.sflag [#allocation3], 1
    %14 = vsyncpa %s13, 0
    %15 = vsyncpa [#allocation5], 0
    %s16 = scalar_lea.sflag [#allocation5], 1
    %17 = vsyncpa %s16, 0
    loop: start=0, step=1, limit=4
    $region2: #{tpu_custom_call.1} parent=1 // loop_pre_header
      _
    $region3: #{tpu_custom_call.1} parent=1 // loop_header
      %s19 = sphi 0, %s23
      %p20 = scmp.ge.s32.totalorder %s19, 4
      %s29 = sphi 0, %s31
      %s32 = sphi 0, %s29
      %s33 = sphi 0, %s32
      %s49 = sphi 0, %s33
      %s55 = sphi 0, %s57
      %s58 = sphi 0, %s55
      %s59 = sphi 0, %s58
      %s75 = sphi 0, %s59
      %s79 = sphi 0, %s79
      %s81 = sphi 0, %s79
      %s82 = sphi 0, %s81
      %s96 = sphi 0, %s82
      %s100 = sphi 0, %s100
      %s102 = sphi 0, %s100
      %s103 = sphi 0, %s102
      %s117 = sphi 0, %s103
      %s123 = sphi 0, %s125
      %s126 = sphi 0, %s123
      %s127 = sphi 0, %s126
      %s143 = sphi 0, %s127
      %s149 = sphi 0, %s151
      %s152 = sphi 0, %s149
      %s153 = sphi 0, %s152
      %s169 = sphi 0, %s153
      %s175 = sphi 0, %s177
      %s178 = sphi 0, %s175
      %s179 = sphi 0, %s178
      %s195 = sphi 0, %s179
    $region4: #{tpu_custom_call.1} parent=1 // loop_header_branch
      %22 = sbr.rel (%p20) target = $region8
    $region5: #{tpu_custom_call.1} parent=1 // loop_body
      %s24 = ssub.s32 %s19, 1
      %s25 = ssub.s32 %s19, 2
      %s26 = sadd.s32 %s19, 1
      %s27 = ssub.s32 %s19, %s26
      %p28 = scmp.eq.s32.totalorder %s27, 0
      %s30 = sadd.s32 %s29, 1
      %s31 = scalar_select %p28, %s29, %s30
      %p34 = pneg %p28
      %p35 = scmp.eq.s32.totalorder %s19, 1
      %p36 = por %p34, %p35
      %p37 = scmp.ne.s32.totalorder %s29, %s32
      %p38 = scmp.eq.s32.totalorder %s19, 0
      %p39 = por %p37, %p38
      %p40 = scmp.ne.s32.totalorder %s29, %s32
      %p41 = scmp.eq.s32.totalorder %s24, 1
      %p42 = por %p40, %p41
      %p43 = scmp.ne.s32.totalorder %s32, %s33
      %p44 = scmp.eq.s32.totalorder %s24, 0
      %p45 = por %p43, %p44
      %p46 = scmp.ne.s32.totalorder %s32, %s33
      %p47 = scmp.eq.s32.totalorder %s25, 1
      %p48 = por %p46, %p47
      %p50 = scmp.ne.s32.totalorder %s33, %s49
      %p51 = scmp.eq.s32.totalorder %s25, 0
      %p52 = por %p50, %p51
      %s53 = ssub.s32 %s19, %s26
      %p54 = scmp.eq.s32.totalorder %s53, 0
      %s56 = sadd.s32 %s55, 1
      %s57 = scalar_select %p54, %s55, %s56
      %p60 = pneg %p54
      %p61 = scmp.eq.s32.totalorder %s19, 1
      %p62 = por %p60, %p61
      %p63 = scmp.ne.s32.totalorder %s55, %s58
      %p64 = scmp.eq.s32.totalorder %s19, 0
      %p65 = por %p63, %p64
      %p66 = scmp.ne.s32.totalorder %s55, %s58
      %p67 = scmp.eq.s32.totalorder %s24, 1
      %p68 = por %p66, %p67
      %p69 = scmp.ne.s32.totalorder %s58, %s59
      %p70 = scmp.eq.s32.totalorder %s24, 0
      %p71 = por %p69, %p70
      %p72 = scmp.ne.s32.totalorder %s58, %s59
      %p73 = scmp.eq.s32.totalorder %s25, 1
      %p74 = por %p72, %p73
      %p76 = scmp.ne.s32.totalorder %s59, %s75
      %p77 = scmp.eq.s32.totalorder %s25, 0
      %p78 = por %p76, %p77
      %s80 = sadd.s32 %s79, 1
      %p83 = scmp.eq.s32.totalorder %s19, 1
      %p84 = scmp.ne.s32.totalorder %s79, %s81
      %p85 = scmp.eq.s32.totalorder %s19, 0
      %p86 = por %p84, %p85
      %p87 = scmp.ne.s32.totalorder %s79, %s81
      %p88 = scmp.eq.s32.totalorder %s24, 1
      %p89 = por %p87, %p88
      %p90 = scmp.ne.s32.totalorder %s81, %s82
      %p91 = scmp.eq.s32.totalorder %s24, 0
      %p92 = por %p90, %p91
      %p93 = scmp.ne.s32.totalorder %s81, %s82
      %p94 = scmp.eq.s32.totalorder %s25, 1
      %p95 = por %p93, %p94
      %p97 = scmp.ne.s32.totalorder %s82, %s96
      %p98 = scmp.eq.s32.totalorder %s25, 0
      %p99 = por %p97, %p98
      %s101 = sadd.s32 %s100, 1
      %p104 = scmp.eq.s32.totalorder %s19, 1
      %p105 = scmp.ne.s32.totalorder %s100, %s102
      %p106 = scmp.eq.s32.totalorder %s19, 0
      %p107 = por %p105, %p106
      %p108 = scmp.ne.s32.totalorder %s100, %s102
      %p109 = scmp.eq.s32.totalorder %s24, 1
      %p110 = por %p108, %p109
      %p111 = scmp.ne.s32.totalorder %s102, %s103
      %p112 = scmp.eq.s32.totalorder %s24, 0
      %p113 = por %p111, %p112
      %p114 = scmp.ne.s32.totalorder %s102, %s103
      %p115 = scmp.eq.s32.totalorder %s25, 1
      %p116 = por %p114, %p115
      %p118 = scmp.ne.s32.totalorder %s103, %s117
      %p119 = scmp.eq.s32.totalorder %s25, 0
      %p120 = por %p118, %p119
      %s121 = ssub.s32 %s19, %s26
      %p122 = scmp.eq.s32.totalorder %s121, 0
      %s124 = sadd.s32 %s123, 1
      %s125 = scalar_select %p122, %s123, %s124
      %p128 = pneg %p122
      %p129 = scmp.eq.s32.totalorder %s19, 1
      %p130 = por %p128, %p129
      %p131 = scmp.ne.s32.totalorder %s123, %s126
      %p132 = scmp.eq.s32.totalorder %s19, 0
      %p133 = por %p131, %p132
      %p134 = scmp.ne.s32.totalorder %s123, %s126
      %p135 = scmp.eq.s32.totalorder %s24, 1
      %p136 = por %p134, %p135
      %p137 = scmp.ne.s32.totalorder %s126, %s127
      %p138 = scmp.eq.s32.totalorder %s24, 0
      %p139 = por %p137, %p138
      %p140 = scmp.ne.s32.totalorder %s126, %s127
      %p141 = scmp.eq.s32.totalorder %s25, 1
      %p142 = por %p140, %p141
      %p144 = scmp.ne.s32.totalorder %s127, %s143
      %p145 = scmp.eq.s32.totalorder %s25, 0
      %p146 = por %p144, %p145
      %s147 = ssub.s32 %s19, %s26
      %p148 = scmp.eq.s32.totalorder %s147, 0
      %s150 = sadd.s32 %s149, 1
      %s151 = scalar_select %p148, %s149, %s150
      %p154 = pneg %p148
      %p155 = scmp.eq.s32.totalorder %s19, 1
      %p156 = por %p154, %p155
      %p157 = scmp.ne.s32.totalorder %s149, %s152
      %p158 = scmp.eq.s32.totalorder %s19, 0
      %p159 = por %p157, %p158
      %p160 = scmp.ne.s32.totalorder %s149, %s152
      %p161 = scmp.eq.s32.totalorder %s24, 1
      %p162 = por %p160, %p161
      %p163 = scmp.ne.s32.totalorder %s152, %s153
      %p164 = scmp.eq.s32.totalorder %s24, 0
      %p165 = por %p163, %p164
      %p166 = scmp.ne.s32.totalorder %s152, %s153
      %p167 = scmp.eq.s32.totalorder %s25, 1
      %p168 = por %p166, %p167
      %p170 = scmp.ne.s32.totalorder %s153, %s169
      %p171 = scmp.eq.s32.totalorder %s25, 0
      %p172 = por %p170, %p171
      %s173 = ssub.s32 %s19, %s26
      %p174 = scmp.eq.s32.totalorder %s173, 0
      %s176 = sadd.s32 %s175, 1
      %s177 = scalar_select %p174, %s175, %s176
      %p180 = pneg %p174
      %p181 = scmp.eq.s32.totalorder %s19, 1
      %p182 = por %p180, %p181
      %p183 = scmp.ne.s32.totalorder %s175, %s178
      %p184 = scmp.eq.s32.totalorder %s19, 0
      %p185 = por %p183, %p184
      %p186 = scmp.ne.s32.totalorder %s175, %s178
      %p187 = scmp.eq.s32.totalorder %s24, 1
      %p188 = por %p186, %p187
      %p189 = scmp.ne.s32.totalorder %s178, %s179
      %p190 = scmp.eq.s32.totalorder %s24, 0
      %p191 = por %p189, %p190
      %p192 = scmp.ne.s32.totalorder %s178, %s179
      %p193 = scmp.eq.s32.totalorder %s25, 1
      %p194 = por %p192, %p193
      %p196 = scmp.ne.s32.totalorder %s179, %s195
      %p197 = scmp.eq.s32.totalorder %s25, 0
      %p198 = por %p196, %p197
      %p199 = scmp.le.s32.totalorder 1, %s19
      %p200 = scmp.lt.s32.totalorder %s19, 3
      %p201 = pnand %p199, %p200
      %p202 = pneg %p201
      // Predicated region
      $region9: #{tpu_custom_call.1} parent=5 // pred_check
        _
      $region10: #{tpu_custom_call.1} parent=5 // pred_check_branch
        %204 = sbr.rel (%p201) target = $region12
      $region11: #{tpu_custom_call.1} parent=5 // pred_region
        %s205 = ssub.s32 %s19, 1
        // Predicated region
        $region13: #{tpu_custom_call.1} parent=11 // pred_check
          %p206 = pneg %p92
        $region14: #{tpu_custom_call.1} parent=11 // pred_check_branch
          %208 = sbr.rel (%p206) target = $region16
        $region15: #{tpu_custom_call.1} parent=11 // pred_region
          _
        $region16: #{tpu_custom_call.1} parent=11 // pred_fallthru
          _
        // Predicated region
        $region17: #{tpu_custom_call.1} parent=11 // pred_check
          %p209 = pneg %p113
        $region18: #{tpu_custom_call.1} parent=11 // pred_check_branch
          %211 = sbr.rel (%p209) target = $region20
        $region19: #{tpu_custom_call.1} parent=11 // pred_region
          _
        $region20: #{tpu_custom_call.1} parent=11 // pred_fallthru
          _
      $region12: #{tpu_custom_call.1} parent=5 // pred_fallthru
        _
      %p212 = scmp.lt.s32.totalorder %s19, 2
      // Predicated region
      $region21: #{tpu_custom_call.1} parent=5 // pred_check
        %p213 = pneg %p212
      $region22: #{tpu_custom_call.1} parent=5 // pred_check_branch
        %215 = sbr.rel (%p213) target = $region24
      $region23: #{tpu_custom_call.1} parent=5 // pred_region
        // Predicated region
        $region25: #{tpu_custom_call.1} parent=23 // pred_check
          %p216 = pneg %p39
        $region26: #{tpu_custom_call.1} parent=23 // pred_check_branch
          %218 = sbr.rel (%p216) target = $region28
        $region27: #{tpu_custom_call.1} parent=23 // pred_region
          %p219 = scmp.lt.s32.totalorder %s19, 1
          %s220 = scalar_select %p219, %s19, 1
          %s221 = smul.addr %s220, 2
          %s222 = smul.addr %s221, 8
          %s223 = scalar_lea.vmem %s0, %s222
        $region28: #{tpu_custom_call.1} parent=23 // pred_fallthru
          _
        // Predicated region
        $region29: #{tpu_custom_call.1} parent=23 // pred_check
          %p224 = pneg %p65
        $region30: #{tpu_custom_call.1} parent=23 // pred_check_branch
          %226 = sbr.rel (%p224) target = $region32
        $region31: #{tpu_custom_call.1} parent=23 // pred_region
          %p227 = scmp.lt.s32.totalorder %s19, 1
          %s228 = scalar_select %p227, %s19, 1
          %s229 = smul.addr %s228, 2
          %s230 = smul.addr %s229, 8
          %s231 = scalar_lea.vmem %s1, %s230
        $region32: #{tpu_custom_call.1} parent=23 // pred_fallthru
          _
      $region24: #{tpu_custom_call.1} parent=5 // pred_fallthru
        _
      %p232 = scmp.le.s32.totalorder 1, %s19
      %p233 = scmp.lt.s32.totalorder %s19, 3
      %p234 = pnand %p232, %p233
      %p235 = pneg %p234
      // Predicated region
      $region33: #{tpu_custom_call.1} parent=5 // pred_check
        _
      $region34: #{tpu_custom_call.1} parent=5 // pred_check_branch
        %237 = sbr.rel (%p234) target = $region36
      $region35: #{tpu_custom_call.1} parent=5 // pred_region
        %s238 = ssub.s32 %s19, 1
        %p239 = scmp.lt.s32.totalorder %s24, 1
        %s240 = scalar_select %p239, %s24, 1
        %s241 = smul.addr %s240, 2
        %s242 = smul.addr %s241, 8
        %s243 = scalar_lea.vmem %s0, %s242
        %p244 = pneg %p45
        %p245 = pneg %p42
        %p246 = scmp.lt.s32.totalorder %s24, 1
        %s247 = scalar_select %p246, %s24, 1
        %s248 = smul.addr %s247, 2
        %s249 = smul.addr %s248, 8
        %s250 = scalar_lea.vmem %s1, %s249
        %p251 = pneg %p71
        %p252 = pneg %p68
        %p253 = pneg %p92
        %p254 = pneg %p89
        %p255 = pneg %p113
        %p256 = pneg %p110
        %p257 = pneg %p139
        %p258 = pneg %p136
        %s259 = sand.u32 %s126, 1
        %s260 = scalar_lea.sflag [#allocation3], %s259
        %s261 = sand.u32 %s126, 1
        %s262 = smul.addr %s261, 8
        %s263 = scalar_lea.vmem [#allocation2], %s262
        %p264 = pneg %p165
        %p265 = pneg %p162
        %s266 = sand.u32 %s24, 1
        %s267 = scalar_lea.sflag [#allocation5], %s266
        %s268 = sand.u32 %s152, 1
        %s269 = smul.addr %s268, 8
        %s270 = scalar_lea.vmem [#allocation4], %s269
        %p271 = pneg %p191
        %p272 = pneg %p188
        %s273 = sand.u32 %s24, 1
        %s274 = scalar_lea.sflag [#allocation5], %s273
        %s275 = sand.u32 %s178, 1
        %s276 = scalar_lea.vmem [#allocation6], %s275
        %p277 = scmp.lt.s32.totalorder %s24, 1
        %s278 = scalar_select %p277, %s24, 1
        %s279 = smul.addr %s278, 2
        %s280 = smul.addr %s279, 8
        %s281 = scalar_lea.vmem %s0, %s280
        %p282 = scmp.lt.s32.totalorder %s24, 1
        %s283 = scalar_select %p282, %s24, 1
        %s284 = smul.addr %s283, 2
        %s285 = smul.addr %s284, 8
        %s286 = scalar_lea.vmem %s1, %s285
        %v287 = vld [vmem:[%s2] sm:$0xff]
        %v288 = vld [vmem:[%s3] sm:$0xff]
        %v289 = vlaneseq
        %v290 = vshrl.u32 %v289, 7
        %v291 = vlaneseq
        %v292 = vand.u32 %v291, 127
        %vm293 = vcmp.eq.s32.totalorder %v290, %v292
        %v294 = vsel %vm293, 1, 0
        %v295 = vcvt.s32.f32 %v294
        %v296 = vld [vmem:[%s281] sm:$0xff]
        %v297 = vld [vmem:[%s281 + $0x8] sm:$0xff]
        %v298 = vld [vmem:[%s286] sm:$0xff]
        %v299 = vld [vmem:[%s286 + $0x8] sm:$0xff]
        %vm300 = vcmask 130048
        %v301 = vsel %vm300, %v298, 0.0
        %302 = vadd.xlane.f32.xlu0 %v301
        %v303 = vpop.xlane.xlu0 %302
        %v304 = vsel %vm300, %v299, 0.0
        %305 = vadd.xlane.f32.xlu0 %v304
        %v306 = vpop.xlane.xlu0 %305
        %v307 = vadd.f32 %v303, 1.0
        %v308 = vadd.f32 %v306, 1.0
        %v309 = vrsqrt.pop %v307
        %v310 = vrsqrt.pop %v308
        %v311 = vmul.f32 %v296, %v309
        %v312 = vmul.f32 %v297, %v310
        %v314 = vsel %vm300, %v298, 0
        %v317 = vsel %vm300, %v299, 0
        %319 = vmatprep.subr.mxu0 0.0
        %320 = vmatpush1.msra.mxu0 %v311
        %321 = vmatprep.subr.mxu0 0.0
        %322 = vmatpush1.msra.mxu0 %v312
        %323 = vmatprep.subr.mxu0 0.0
        %324 = vmatpush1.msra.mxu0 0.0
        %325 = vmatprep.subr.mxu0 0.0
        %326 = vmatpush1.msra.mxu0 0.0
        %327 = vmatprep.subr.mxu0 0.0
        %328 = vmatpush1.msra.mxu0 0.0
        %329 = vmatprep.subr.mxu0 0.0
        %330 = vmatpush1.msra.mxu0 0.0
        %331 = vmatprep.subr.mxu0 0.0
        %332 = vmatpush1.msra.mxu0 0.0
        %333 = vmatprep.subr.mxu0 0.0
        %334 = vmatpush1.msra.mxu0 0.0
        %335 = vmatprep.subr.mxu0 0.0
        %336 = vmatpush1.msra.mxu0 0.0
        %337 = vmatprep.subr.mxu0 0.0
        %338 = vmatpush1.msra.mxu0 0.0
        %339 = vmatprep.subr.mxu0 0.0
        %340 = vmatpush1.msra.mxu0 0.0
        %341 = vmatprep.subr.mxu0 0.0
        %342 = vmatpush1.msra.mxu0 0.0
        %343 = vmatprep.subr.mxu0 0.0
        %344 = vmatpush1.msra.mxu0 0.0
        %345 = vmatprep.subr.mxu0 0.0
        %346 = vmatpush1.msra.mxu0 0.0
        %347 = vmatprep.subr.mxu0 0.0
        %348 = vmatpush1.msra.mxu0 0.0
        %349 = vmatprep.subr.mxu0 0.0
        %350 = vmatpush1.msra.mxu0 0.0
        %351 = vmatprep.subr.mxu0 0.0
        %352 = vmatpush1.msra.mxu0 0.0
        %353 = vmatprep.subr.mxu0 0.0
        %354 = vmatpush1.msra.mxu0 0.0
        %355 = vmatprep.subr.mxu0 0.0
        %356 = vmatpush1.msra.mxu0 0.0
        %357 = vmatprep.subr.mxu0 0.0
        %358 = vmatpush1.msra.mxu0 0.0
        %359 = vmatprep.subr.mxu0 0.0
        %360 = vmatpush1.msra.mxu0 0.0
        %361 = vmatprep.subr.mxu0 0.0
        %362 = vmatpush1.msra.mxu0 0.0
        %363 = vmatprep.subr.mxu0 0.0
        %364 = vmatpush1.msra.mxu0 0.0
        %365 = vmatprep.subr.mxu0 0.0
        %366 = vmatpush1.msra.mxu0 0.0
        %367 = vmatprep.subr.mxu0 0.0
        %368 = vmatpush1.msra.mxu0 0.0
        %369 = vmatprep.subr.mxu0 0.0
        %370 = vmatpush1.msra.mxu0 0.0
        %371 = vmatprep.subr.mxu0 0.0
        %372 = vmatpush1.msra.mxu0 0.0
        %373 = vmatprep.subr.mxu0 0.0
        %374 = vmatpush1.msra.mxu0 0.0
        %375 = vmatprep.subr.mxu0 0.0
        %376 = vmatpush1.msra.mxu0 0.0
        %377 = vmatprep.subr.mxu0 0.0
        %378 = vmatpush1.msra.mxu0 0.0
        %379 = vmatprep.subr.mxu0 0.0
        %380 = vmatpush1.msra.mxu0 0.0
        %381 = vmatprep.subr.mxu0 0.0
        %382 = vmatpush1.msra.mxu0 0.0
        %383 = vmatprep.mubr.f32.mxu0 0.0
        %384 = vmatmul.mubr.f32.gmra.mrb[0].mxu0 %v314
        %v385 = vpop.f32.mrb[0].mxu0
        %v386 = vadd.f32 %v311, %v385
        %v387 = vpop.f32.mrb[0].mxu0
        %388 = vmatprep.mubr.f32.mxu0 0.0
        %389 = vmatmul.mubr.f32.gmra.mrb[0].mxu0 %v317
        %v390 = vpop.f32.mrb[0].mxu0
        %v391 = vadd.f32 %v312, %v390
        %v392 = vpop.f32.mrb[0].mxu0
        %393 = vdwg.mxu0
        %v394 = vmul.f32 %v309, %v386
        %v395 = vmul.f32 %v310, %v391
        %vm396 = vcmask 64512
        %v398 = vsel %vm396, %v394, 0
        %v401 = vsel %vm396, %v395, 0
        %403 = vmatprep.subr.mxu0 0.0
        %404 = vmatpush1.msra.mxu0 %v287
        %405 = vmatprep.subr.mxu0 0.0
        %406 = vmatpush1.msra.mxu0 0.0
        %407 = vmatprep.subr.mxu0 0.0
        %408 = vmatpush1.msra.mxu0 0.0
        %409 = vmatprep.subr.mxu0 0.0
        %410 = vmatpush1.msra.mxu0 0.0
        %411 = vmatprep.subr.mxu0 0.0
        %412 = vmatpush1.msra.mxu0 0.0
        %413 = vmatprep.subr.mxu0 0.0
        %414 = vmatpush1.msra.mxu0 0.0
        %415 = vmatprep.subr.mxu0 0.0
        %416 = vmatpush1.msra.mxu0 0.0
        %417 = vmatprep.subr.mxu0 0.0
        %418 = vmatpush1.msra.mxu0 0.0
        %419 = vmatprep.subr.mxu0 0.0
        %420 = vmatpush1.msra.mxu0 0.0
        %421 = vmatprep.subr.mxu0 0.0
        %422 = vmatpush1.msra.mxu0 0.0
        %423 = vmatprep.subr.mxu0 0.0
        %424 = vmatpush1.msra.mxu0 0.0
        %425 = vmatprep.subr.mxu0 0.0
        %426 = vmatpush1.msra.mxu0 0.0
        %427 = vmatprep.subr.mxu0 0.0
        %428 = vmatpush1.msra.mxu0 0.0
        %429 = vmatprep.subr.mxu0 0.0
        %430 = vmatpush1.msra.mxu0 0.0
        %431 = vmatprep.subr.mxu0 0.0
        %432 = vmatpush1.msra.mxu0 0.0
        %433 = vmatprep.subr.mxu0 0.0
        %434 = vmatpush1.msra.mxu0 0.0
        %435 = vmatprep.subr.mxu0 0.0
        %436 = vmatpush1.msra.mxu0 0.0
        %437 = vmatprep.subr.mxu0 0.0
        %438 = vmatpush1.msra.mxu0 0.0
        %439 = vmatprep.subr.mxu0 0.0
        %440 = vmatpush1.msra.mxu0 0.0
        %441 = vmatprep.subr.mxu0 0.0
        %442 = vmatpush1.msra.mxu0 0.0
        %443 = vmatprep.subr.mxu0 0.0
        %444 = vmatpush1.msra.mxu0 0.0
        %445 = vmatprep.subr.mxu0 0.0
        %446 = vmatpush1.msra.mxu0 0.0
        %447 = vmatprep.subr.mxu0 0.0
        %448 = vmatpush1.msra.mxu0 0.0
        %449 = vmatprep.subr.mxu0 0.0
        %450 = vmatpush1.msra.mxu0 0.0
        %451 = vmatprep.subr.mxu0 0.0
        %452 = vmatpush1.msra.mxu0 0.0
        %453 = vmatprep.subr.mxu0 0.0
        %454 = vmatpush1.msra.mxu0 0.0
        %455 = vmatprep.subr.mxu0 0.0
        %456 = vmatpush1.msra.mxu0 0.0
        %457 = vmatprep.subr.mxu0 0.0
        %458 = vmatpush1.msra.mxu0 0.0
        %459 = vmatprep.subr.mxu0 0.0
        %460 = vmatpush1.msra.mxu0 0.0
        %461 = vmatprep.subr.mxu0 0.0
        %462 = vmatpush1.msra.mxu0 0.0
        %463 = vmatprep.subr.mxu0 0.0
        %464 = vmatpush1.msra.mxu0 0.0
        %465 = vmatprep.subr.mxu0 0.0
        %466 = vmatpush1.msra.mxu0 0.0
        %467 = vmatprep.mubr.f32.mxu0 0.0
        %468 = vmatmul.mubr.f32.gmra.mrb[0].mxu0 %v398
        %v469 = vpop.f32.mrb[0].mxu0
        %v470 = vadd.f32 0.0, %v469
        %v471 = vpop.f32.mrb[0].mxu0
        %472 = vmatprep.mubr.f32.mxu0 0.0
        %473 = vmatmul.mubr.f32.gmra.mrb[0].mxu0 %v401
        %v474 = vpop.f32.mrb[0].mxu0
        %v475 = vadd.f32 0.0, %v474
        %v476 = vpop.f32.mrb[0].mxu0
        %477 = vdwg.mxu0
        %v478 = vmax.f32 %v470, 0.0
        %v479 = vmax.f32 %v475, 0.0
        %480 = vmatprep.subr.mxu0 0.0
        %481 = vmatpush1.msra.mxu0 %v288
        %482 = vmatprep.subr.mxu0 0.0
        %483 = vmatpush1.msra.mxu0 0.0
        %484 = vmatprep.subr.mxu0 0.0
        %485 = vmatpush1.msra.mxu0 0.0
        %486 = vmatprep.subr.mxu0 0.0
        %487 = vmatpush1.msra.mxu0 0.0
        %488 = vmatprep.subr.mxu0 0.0
        %489 = vmatpush1.msra.mxu0 0.0
        %490 = vmatprep.subr.mxu0 0.0
        %491 = vmatpush1.msra.mxu0 0.0
        %492 = vmatprep.subr.mxu0 0.0
        %493 = vmatpush1.msra.mxu0 0.0
        %494 = vmatprep.subr.mxu0 0.0
        %495 = vmatpush1.msra.mxu0 0.0
        %496 = vmatprep.subr.mxu0 0.0
        %497 = vmatpush1.msra.mxu0 0.0
        %498 = vmatprep.subr.mxu0 0.0
        %499 = vmatpush1.msra.mxu0 0.0
        %500 = vmatprep.subr.mxu0 0.0
        %501 = vmatpush1.msra.mxu0 0.0
        %502 = vmatprep.subr.mxu0 0.0
        %503 = vmatpush1.msra.mxu0 0.0
        %504 = vmatprep.subr.mxu0 0.0
        %505 = vmatpush1.msra.mxu0 0.0
        %506 = vmatprep.subr.mxu0 0.0
        %507 = vmatpush1.msra.mxu0 0.0
        %508 = vmatprep.subr.mxu0 0.0
        %509 = vmatpush1.msra.mxu0 0.0
        %510 = vmatprep.subr.mxu0 0.0
        %511 = vmatpush1.msra.mxu0 0.0
        %512 = vmatprep.subr.mxu0 0.0
        %513 = vmatpush1.msra.mxu0 0.0
        %514 = vmatprep.subr.mxu0 0.0
        %515 = vmatpush1.msra.mxu0 0.0
        %516 = vmatprep.subr.mxu0 0.0
        %517 = vmatpush1.msra.mxu0 0.0
        %518 = vmatprep.subr.mxu0 0.0
        %519 = vmatpush1.msra.mxu0 0.0
        %520 = vmatprep.subr.mxu0 0.0
        %521 = vmatpush1.msra.mxu0 0.0
        %522 = vmatprep.subr.mxu0 0.0
        %523 = vmatpush1.msra.mxu0 0.0
        %524 = vmatprep.subr.mxu0 0.0
        %525 = vmatpush1.msra.mxu0 0.0
        %526 = vmatprep.subr.mxu0 0.0
        %527 = vmatpush1.msra.mxu0 0.0
        %528 = vmatprep.subr.mxu0 0.0
        %529 = vmatpush1.msra.mxu0 0.0
        %530 = vmatprep.subr.mxu0 0.0
        %531 = vmatpush1.msra.mxu0 0.0
        %532 = vmatprep.subr.mxu0 0.0
        %533 = vmatpush1.msra.mxu0 0.0
        %534 = vmatprep.subr.mxu0 0.0
        %535 = vmatpush1.msra.mxu0 0.0
        %536 = vmatprep.subr.mxu0 0.0
        %537 = vmatpush1.msra.mxu0 0.0
        %538 = vmatprep.subr.mxu0 0.0
        %539 = vmatpush1.msra.mxu0 0.0
        %540 = vmatprep.subr.mxu0 0.0
        %541 = vmatpush1.msra.mxu0 0.0
        %542 = vmatprep.subr.mxu0 0.0
        %543 = vmatpush1.msra.mxu0 0.0
        %544 = vmatprep.mubr.f32.mxu0 0.0
        %545 = vmatmul.mubr.f32.gmra.mrb[0].mxu0 %v398
        %v546 = vpop.f32.mrb[0].mxu0
        %v547 = vadd.f32 0.0, %v546
        %v548 = vpop.f32.mrb[0].mxu0
        %549 = vmatprep.mubr.f32.mxu0 0.0
        %550 = vmatmul.mubr.f32.gmra.mrb[0].mxu0 %v401
        %v551 = vpop.f32.mrb[0].mxu0
        %v552 = vadd.f32 0.0, %v551
        %v553 = vpop.f32.mrb[0].mxu0
        %554 = vdwg.mxu0
        %v555 = vmax.f32 %v547, 0.0
        %v556 = vmax.f32 %v552, 0.0
        %v557 = vsel %vm396, %v478, -inf
        %558 = vmax.xlane.f32.xlu0 %v557
        %v559 = vpop.xlane.xlu0 %558
        %v560 = vsel %vm396, %v479, -inf
        %561 = vmax.xlane.f32.xlu0 %v560
        %v562 = vpop.xlane.xlu0 %561
        %v563 = vsub.f32 %v478, %v559
        %v564 = vsub.f32 %v479, %v562
        %v565 = vmul.f32 %v563, 1.442695
        %v566 = vpow.pop %v565
        %v567 = vmul.f32 %v564, 1.442695
        %v568 = vpow.pop %v567
        %v569 = vsel %vm396, %v566, 0.0
        %570 = vadd.xlane.f32.xlu0 %v569
        %v571 = vpop.xlane.xlu0 %570
        %v572 = vsel %vm396, %v568, 0.0
        %573 = vadd.xlane.f32.xlu0 %v572
        %v574 = vpop.xlane.xlu0 %573
        %v575 = vrcp.pop %v571
        %v576 = vrcp.pop %v574
        %v577 = vmul.f32 %v566, %v575
        %v578 = vmul.f32 %v568, %v576
        %579 = vxpose.xlu0.b32.start [1/16] %v577, 128
        %580 = vxpose.xlu0.b32.cont [2/16] %v578, 128
        %581 = vxpose.xlu0.b32.cont [3/16] 0.0, 128
        %582 = vxpose.xlu0.b32.cont [4/16] 0.0, 128
        %583 = vxpose.xlu0.b32.cont [5/16] 0.0, 128
        %584 = vxpose.xlu0.b32.cont [6/16] 0.0, 128
        %585 = vxpose.xlu0.b32.cont [7/16] 0.0, 128
        %586 = vxpose.xlu0.b32.cont [8/16] 0.0, 128
        %587 = vxpose.xlu0.b32.cont [9/16] 0.0, 128
        %588 = vxpose.xlu0.b32.cont [10/16] 0.0, 128
        %589 = vxpose.xlu0.b32.cont [11/16] 0.0, 128
        %590 = vxpose.xlu0.b32.cont [12/16] 0.0, 128
        %591 = vxpose.xlu0.b32.cont [13/16] 0.0, 128
        %592 = vxpose.xlu0.b32.cont [14/16] 0.0, 128
        %593 = vxpose.xlu0.b32.cont [15/16] 0.0, 128
        %594 = vxpose.xlu0.b32.end [16/16] 0.0, 128
        %v595 = vpop.trf.xlu0
        %v596 = vpop.trf.xlu0
        %v597 = vpop.trf.xlu0
        %v598 = vpop.trf.xlu0
        %v599 = vpop.trf.xlu0
        %v600 = vpop.trf.xlu0
        %v601 = vpop.trf.xlu0
        %v602 = vpop.trf.xlu0
        %v603 = vpop.trf.xlu0
        %v604 = vpop.trf.xlu0
        %v605 = vpop.trf.xlu0
        %v606 = vpop.trf.xlu0
        %v607 = vpop.trf.xlu0
        %v608 = vpop.trf.xlu0
        %v609 = vpop.trf.xlu0
        %v610 = vpop.trf.xlu0
        %v612 = vsel %vm300, %v595, 0
        %614 = vmatprep.subr.mxu0 0.0
        %615 = vmatpush1.msra.mxu0 %v555
        %616 = vmatprep.subr.mxu0 0.0
        %617 = vmatpush1.msra.mxu0 %v556
        %618 = vmatprep.subr.mxu0 0.0
        %619 = vmatpush1.msra.mxu0 0.0
        %620 = vmatprep.subr.mxu0 0.0
        %621 = vmatpush1.msra.mxu0 0.0
        %622 = vmatprep.subr.mxu0 0.0
        %623 = vmatpush1.msra.mxu0 0.0
        %624 = vmatprep.subr.mxu0 0.0
        %625 = vmatpush1.msra.mxu0 0.0
        %626 = vmatprep.subr.mxu0 0.0
        %627 = vmatpush1.msra.mxu0 0.0
        %628 = vmatprep.subr.mxu0 0.0
        %629 = vmatpush1.msra.mxu0 0.0
        %630 = vmatprep.subr.mxu0 0.0
        %631 = vmatpush1.msra.mxu0 0.0
        %632 = vmatprep.subr.mxu0 0.0
        %633 = vmatpush1.msra.mxu0 0.0
        %634 = vmatprep.subr.mxu0 0.0
        %635 = vmatpush1.msra.mxu0 0.0
        %636 = vmatprep.subr.mxu0 0.0
        %637 = vmatpush1.msra.mxu0 0.0
        %638 = vmatprep.subr.mxu0 0.0
        %639 = vmatpush1.msra.mxu0 0.0
        %640 = vmatprep.subr.mxu0 0.0
        %641 = vmatpush1.msra.mxu0 0.0
        %642 = vmatprep.subr.mxu0 0.0
        %643 = vmatpush1.msra.mxu0 0.0
        %644 = vmatprep.subr.mxu0 0.0
        %645 = vmatpush1.msra.mxu0 0.0
        %646 = vmatprep.subr.mxu0 0.0
        %647 = vmatpush1.msra.mxu0 0.0
        %648 = vmatprep.subr.mxu0 0.0
        %649 = vmatpush1.msra.mxu0 0.0
        %650 = vmatprep.subr.mxu0 0.0
        %651 = vmatpush1.msra.mxu0 0.0
        %652 = vmatprep.subr.mxu0 0.0
        %653 = vmatpush1.msra.mxu0 0.0
        %654 = vmatprep.subr.mxu0 0.0
        %655 = vmatpush1.msra.mxu0 0.0
        %656 = vmatprep.subr.mxu0 0.0
        %657 = vmatpush1.msra.mxu0 0.0
        %658 = vmatprep.subr.mxu0 0.0
        %659 = vmatpush1.msra.mxu0 0.0
        %660 = vmatprep.subr.mxu0 0.0
        %661 = vmatpush1.msra.mxu0 0.0
        %662 = vmatprep.subr.mxu0 0.0
        %663 = vmatpush1.msra.mxu0 0.0
        %664 = vmatprep.subr.mxu0 0.0
        %665 = vmatpush1.msra.mxu0 0.0
        %666 = vmatprep.subr.mxu0 0.0
        %667 = vmatpush1.msra.mxu0 0.0
        %668 = vmatprep.subr.mxu0 0.0
        %669 = vmatpush1.msra.mxu0 0.0
        %670 = vmatprep.subr.mxu0 0.0
        %671 = vmatpush1.msra.mxu0 0.0
        %672 = vmatprep.subr.mxu0 0.0
        %673 = vmatpush1.msra.mxu0 0.0
        %674 = vmatprep.subr.mxu0 0.0
        %675 = vmatpush1.msra.mxu0 0.0
        %676 = vmatprep.subr.mxu0 0.0
        %677 = vmatpush1.msra.mxu0 0.0
        %678 = vmatprep.mubr.f32.mxu0 0.0
        %679 = vmatmul.mubr.f32.gmra.mrb[0].mxu0 %v612
        %v680 = vpop.f32.mrb[0].mxu0
        %v681 = vadd.f32 0.0, %v680
        %v682 = vpop.f32.mrb[0].mxu0
        %683 = vdwg.mxu0
        %684 = vmatprep.subr.mxu0 0.0
        %685 = vmatpush1.msra.mxu0 %v298
        %686 = vmatprep.subr.mxu0 0.0
        %687 = vmatpush1.msra.mxu0 %v299
        %688 = vmatprep.subr.mxu0 0.0
        %689 = vmatpush1.msra.mxu0 0.0
        %690 = vmatprep.subr.mxu0 0.0
        %691 = vmatpush1.msra.mxu0 0.0
        %692 = vmatprep.subr.mxu0 0.0
        %693 = vmatpush1.msra.mxu0 0.0
        %694 = vmatprep.subr.mxu0 0.0
        %695 = vmatpush1.msra.mxu0 0.0
        %696 = vmatprep.subr.mxu0 0.0
        %697 = vmatpush1.msra.mxu0 0.0
        %698 = vmatprep.subr.mxu0 0.0
        %699 = vmatpush1.msra.mxu0 0.0
        %700 = vmatprep.subr.mxu0 0.0
        %701 = vmatpush1.msra.mxu0 0.0
        %702 = vmatprep.subr.mxu0 0.0
        %703 = vmatpush1.msra.mxu0 0.0
        %704 = vmatprep.subr.mxu0 0.0
        %705 = vmatpush1.msra.mxu0 0.0
        %706 = vmatprep.subr.mxu0 0.0
        %707 = vmatpush1.msra.mxu0 0.0
        %708 = vmatprep.subr.mxu0 0.0
        %709 = vmatpush1.msra.mxu0 0.0
        %710 = vmatprep.subr.mxu0 0.0
        %711 = vmatpush1.msra.mxu0 0.0
        %712 = vmatprep.subr.mxu0 0.0
        %713 = vmatpush1.msra.mxu0 0.0
        %714 = vmatprep.subr.mxu0 0.0
        %715 = vmatpush1.msra.mxu0 0.0
        %716 = vmatprep.subr.mxu0 0.0
        %717 = vmatpush1.msra.mxu0 0.0
        %718 = vmatprep.subr.mxu0 0.0
        %719 = vmatpush1.msra.mxu0 0.0
        %720 = vmatprep.subr.mxu0 0.0
        %721 = vmatpush1.msra.mxu0 0.0
        %722 = vmatprep.subr.mxu0 0.0
        %723 = vmatpush1.msra.mxu0 0.0
        %724 = vmatprep.subr.mxu0 0.0
        %725 = vmatpush1.msra.mxu0 0.0
        %726 = vmatprep.subr.mxu0 0.0
        %727 = vmatpush1.msra.mxu0 0.0
        %728 = vmatprep.subr.mxu0 0.0
        %729 = vmatpush1.msra.mxu0 0.0
        %730 = vmatprep.subr.mxu0 0.0
        %731 = vmatpush1.msra.mxu0 0.0
        %732 = vmatprep.subr.mxu0 0.0
        %733 = vmatpush1.msra.mxu0 0.0
        %734 = vmatprep.subr.mxu0 0.0
        %735 = vmatpush1.msra.mxu0 0.0
        %736 = vmatprep.subr.mxu0 0.0
        %737 = vmatpush1.msra.mxu0 0.0
        %738 = vmatprep.subr.mxu0 0.0
        %739 = vmatpush1.msra.mxu0 0.0
        %740 = vmatprep.subr.mxu0 0.0
        %741 = vmatpush1.msra.mxu0 0.0
        %742 = vmatprep.subr.mxu0 0.0
        %743 = vmatpush1.msra.mxu0 0.0
        %744 = vmatprep.subr.mxu0 0.0
        %745 = vmatpush1.msra.mxu0 0.0
        %746 = vmatprep.subr.mxu0 0.0
        %747 = vmatpush1.msra.mxu0 0.0
        %748 = vmatprep.mubr.f32.mxu0 0.0
        %749 = vmatmul.mubr.f32.gmra.mrb[0].mxu0 %v612
        %v750 = vpop.f32.mrb[0].mxu0
        %v751 = vadd.f32 0.0, %v750
        %v752 = vpop.f32.mrb[0].mxu0
        %753 = vdwg.mxu0
        %v755 = vsel %vm300, %v751, 0
        %757 = vmatprep.subr.mxu0 0.0
        %758 = vmatpush1.msra.mxu0 %v577
        %759 = vmatprep.subr.mxu0 0.0
        %760 = vmatpush1.msra.mxu0 %v578
        %761 = vmatprep.subr.mxu0 0.0
        %762 = vmatpush1.msra.mxu0 0.0
        %763 = vmatprep.subr.mxu0 0.0
        %764 = vmatpush1.msra.mxu0 0.0
        %765 = vmatprep.subr.mxu0 0.0
        %766 = vmatpush1.msra.mxu0 0.0
        %767 = vmatprep.subr.mxu0 0.0
        %768 = vmatpush1.msra.mxu0 0.0
        %769 = vmatprep.subr.mxu0 0.0
        %770 = vmatpush1.msra.mxu0 0.0
        %771 = vmatprep.subr.mxu0 0.0
        %772 = vmatpush1.msra.mxu0 0.0
        %773 = vmatprep.subr.mxu0 0.0
        %774 = vmatpush1.msra.mxu0 0.0
        %775 = vmatprep.subr.mxu0 0.0
        %776 = vmatpush1.msra.mxu0 0.0
        %777 = vmatprep.subr.mxu0 0.0
        %778 = vmatpush1.msra.mxu0 0.0
        %779 = vmatprep.subr.mxu0 0.0
        %780 = vmatpush1.msra.mxu0 0.0
        %781 = vmatprep.subr.mxu0 0.0
        %782 = vmatpush1.msra.mxu0 0.0
        %783 = vmatprep.subr.mxu0 0.0
        %784 = vmatpush1.msra.mxu0 0.0
        %785 = vmatprep.subr.mxu0 0.0
        %786 = vmatpush1.msra.mxu0 0.0
        %787 = vmatprep.subr.mxu0 0.0
        %788 = vmatpush1.msra.mxu0 0.0
        %789 = vmatprep.subr.mxu0 0.0
        %790 = vmatpush1.msra.mxu0 0.0
        %791 = vmatprep.subr.mxu0 0.0
        %792 = vmatpush1.msra.mxu0 0.0
        %793 = vmatprep.subr.mxu0 0.0
        %794 = vmatpush1.msra.mxu0 0.0
        %795 = vmatprep.subr.mxu0 0.0
        %796 = vmatpush1.msra.mxu0 0.0
        %797 = vmatprep.subr.mxu0 0.0
        %798 = vmatpush1.msra.mxu0 0.0
        %799 = vmatprep.subr.mxu0 0.0
        %800 = vmatpush1.msra.mxu0 0.0
        %801 = vmatprep.subr.mxu0 0.0
        %802 = vmatpush1.msra.mxu0 0.0
        %803 = vmatprep.subr.mxu0 0.0
        %804 = vmatpush1.msra.mxu0 0.0
        %805 = vmatprep.subr.mxu0 0.0
        %806 = vmatpush1.msra.mxu0 0.0
        %807 = vmatprep.subr.mxu0 0.0
        %808 = vmatpush1.msra.mxu0 0.0
        %809 = vmatprep.subr.mxu0 0.0
        %810 = vmatpush1.msra.mxu0 0.0
        %811 = vmatprep.subr.mxu0 0.0
        %812 = vmatpush1.msra.mxu0 0.0
        %813 = vmatprep.subr.mxu0 0.0
        %814 = vmatpush1.msra.mxu0 0.0
        %815 = vmatprep.subr.mxu0 0.0
        %816 = vmatpush1.msra.mxu0 0.0
        %817 = vmatprep.subr.mxu0 0.0
        %818 = vmatpush1.msra.mxu0 0.0
        %819 = vmatprep.subr.mxu0 0.0
        %820 = vmatpush1.msra.mxu0 0.0
        %821 = vmatprep.mubr.f32.mxu0 0.0
        %822 = vmatmul.mubr.f32.gmra.mrb[0].mxu0 %v755
        %v823 = vpop.f32.mrb[0].mxu0
        %v824 = vadd.f32 0.0, %v823
        %v825 = vpop.f32.mrb[0].mxu0
        %826 = vdwg.mxu0
        %vm827 = vcmask 261120
        %828 = vst.msk [vmem:[%s263] sm:$0xff] %vm827, %v681
        %829 = vst.msk [vmem:[%s270] sm:$0xff] %vm396, %v824
        %830 = vmatprep.subr.mxu0 0.0
        %831 = vmatpush1.msra.mxu0 %v577
        %832 = vmatprep.subr.mxu0 0.0
        %833 = vmatpush1.msra.mxu0 %v578
        %834 = vmatprep.subr.mxu0 0.0
        %835 = vmatpush1.msra.mxu0 0.0
        %836 = vmatprep.subr.mxu0 0.0
        %837 = vmatpush1.msra.mxu0 0.0
        %838 = vmatprep.subr.mxu0 0.0
        %839 = vmatpush1.msra.mxu0 0.0
        %840 = vmatprep.subr.mxu0 0.0
        %841 = vmatpush1.msra.mxu0 0.0
        %842 = vmatprep.subr.mxu0 0.0
        %843 = vmatpush1.msra.mxu0 0.0
        %844 = vmatprep.subr.mxu0 0.0
        %845 = vmatpush1.msra.mxu0 0.0
        %846 = vmatprep.subr.mxu0 0.0
        %847 = vmatpush1.msra.mxu0 0.0
        %848 = vmatprep.subr.mxu0 0.0
        %849 = vmatpush1.msra.mxu0 0.0
        %850 = vmatprep.subr.mxu0 0.0
        %851 = vmatpush1.msra.mxu0 0.0
        %852 = vmatprep.subr.mxu0 0.0
        %853 = vmatpush1.msra.mxu0 0.0
        %854 = vmatprep.subr.mxu0 0.0
        %855 = vmatpush1.msra.mxu0 0.0
        %856 = vmatprep.subr.mxu0 0.0
        %857 = vmatpush1.msra.mxu0 0.0
        %858 = vmatprep.subr.mxu0 0.0
        %859 = vmatpush1.msra.mxu0 0.0
        %860 = vmatprep.subr.mxu0 0.0
        %861 = vmatpush1.msra.mxu0 0.0
        %862 = vmatprep.subr.mxu0 0.0
        %863 = vmatpush1.msra.mxu0 0.0
        %864 = vmatprep.subr.mxu0 0.0
        %865 = vmatpush1.msra.mxu0 0.0
        %866 = vmatprep.subr.mxu0 0.0
        %867 = vmatpush1.msra.mxu0 0.0
        %868 = vmatprep.subr.mxu0 0.0
        %869 = vmatpush1.msra.mxu0 0.0
        %870 = vmatprep.subr.mxu0 0.0
        %871 = vmatpush1.msra.mxu0 0.0
        %872 = vmatprep.subr.mxu0 0.0
        %873 = vmatpush1.msra.mxu0 0.0
        %874 = vmatprep.subr.mxu0 0.0
        %875 = vmatpush1.msra.mxu0 0.0
        %876 = vmatprep.subr.mxu0 0.0
        %877 = vmatpush1.msra.mxu0 0.0
        %878 = vmatprep.subr.mxu0 0.0
        %879 = vmatpush1.msra.mxu0 0.0
        %880 = vmatprep.subr.mxu0 0.0
        %881 = vmatpush1.msra.mxu0 0.0
        %882 = vmatprep.subr.mxu0 0.0
        %883 = vmatpush1.msra.mxu0 0.0
        %884 = vmatprep.subr.mxu0 0.0
        %885 = vmatpush1.msra.mxu0 0.0
        %886 = vmatprep.subr.mxu0 0.0
        %887 = vmatpush1.msra.mxu0 0.0
        %888 = vmatprep.subr.mxu0 0.0
        %889 = vmatpush1.msra.mxu0 0.0
        %890 = vmatprep.subr.mxu0 0.0
        %891 = vmatpush1.msra.mxu0 0.0
        %892 = vmatprep.subr.mxu0 0.0
        %893 = vmatpush1.msra.mxu0 0.0
        %894 = vmatprep.mubr.f32.mxu0 0.0
        %895 = vmatmul.mubr.f32.gmra.mrb[0].mxu0 %v612
        %v896 = vpop.f32.mrb[0].mxu0
        %v897 = vadd.f32 0.0, %v896
        %v898 = vpop.f32.mrb[0].mxu0
        %899 = vdwg.mxu0
        %v900 = vmul.f32 %v824, %v295
        %v901 = vsel %vm396, %v900, 0.0
        %902 = vadd.xlane.f32.xlu0 %v901
        %v903 = vpop.xlane.xlu0 %902
        %v904 = vrot.slane %v903, 4
        %v905 = vadd.f32 %v903, %v904
        %v906 = vrot.slane %v905, 2
        %v907 = vadd.f32 %v905, %v906
        %v908 = vrot.slane %v907, 1
        %v909 = vadd.f32 %v907, %v908
        %s910 = vtos %v909
        %v911 = vmul.f32 %v298, %v298
        %v912 = vmul.f32 %v299, %v299
        %v913 = vsel %vm300, %v911, 0.0
        %v914 = vsel %vm300, %v912, 0.0
        %v915 = vadd.f32 %v913, %v914
        %916 = vadd.xlane.f32.xlu0 %v915
        %v917 = vpop.xlane.xlu0 %916
        %v918 = vrot.slane %v917, 4
        %v919 = vadd.f32 %v917, %v918
        %v920 = vrot.slane %v919, 2
        %v921 = vadd.f32 %v919, %v920
        %v922 = vrot.slane %v921, 1
        %v923 = vadd.f32 %v921, %v922
        %s924 = vtos %v923
        %s925 = smul.f32 %s910, 2.0
        %s926 = ssub.f32 %s924, %s925
        %v927 = vmul.f32 %v897, %v897
        %v928 = vsel %vm396, %v927, 0.0
        %929 = vadd.xlane.f32.xlu0 %v928
        %v930 = vpop.xlane.xlu0 %929
        %v931 = vrot.slane %v930, 4
        %v932 = vadd.f32 %v930, %v931
        %v933 = vrot.slane %v932, 2
        %v934 = vadd.f32 %v932, %v933
        %v935 = vrot.slane %v934, 1
        %v936 = vadd.f32 %v934, %v935
        %s937 = vtos %v936
        %s938 = sadd.f32 %s926, %s937
        %v939 = vlog2.pop %v571
        %v940 = vmul.f32 %v939, 0.6931472
        %v941 = vlog2.pop %v574
        %v942 = vmul.f32 %v941, 0.6931472
        %vm943 = vcmask 7168
        %v944 = vsel %vm943, %v940, 0.0
        %v945 = vsel %vm943, %v942, 0.0
        %v946 = vadd.f32 %v944, %v945
        %947 = vadd.xlane.f32.xlu0 %v946
        %v948 = vpop.xlane.xlu0 %947
        %v949 = vrot.slane %v948, 4
        %v950 = vadd.f32 %v948, %v949
        %v951 = vrot.slane %v950, 2
        %v952 = vadd.f32 %v950, %v951
        %v953 = vrot.slane %v952, 1
        %v954 = vadd.f32 %v952, %v953
        %s955 = vtos %v954
        %v956 = vmul.f32 %v577, %v563
        %v957 = vmul.f32 %v578, %v564
        %v958 = vsel %vm396, %v956, 0.0
        %v959 = vsel %vm396, %v957, 0.0
        %v960 = vadd.f32 %v958, %v959
        %961 = vadd.xlane.f32.xlu0 %v960
        %v962 = vpop.xlane.xlu0 %961
        %v963 = vrot.slane %v962, 4
        %v964 = vadd.f32 %v962, %v963
        %v965 = vrot.slane %v964, 2
        %v966 = vadd.f32 %v964, %v965
        %v967 = vrot.slane %v966, 1
        %v968 = vadd.f32 %v966, %v967
        %s969 = vtos %v968
        %s970 = ssub.f32 %s955, %s969
        %vm971 = vcmp.eq.s32.totalorder %v292, 0
        %v972 = vstv %s938
        %v973 = vstv %s970
        %v974 = vsel %vm971, %v972, %v973
        %vm975 = vcmask 8192
        %976 = vst.msk [vmem:[%s276] sm:$0x1] %vm975, %v974
        %s977 = sand.u32 %s126, 1
        %s978 = scalar_lea.sflag [#allocation3], %s977
        %s979 = sand.u32 %s126, 1
        %s980 = smul.addr %s979, 8
        %s981 = scalar_lea.vmem [#allocation2], %s980
        %s982 = sand.u32 %s24, 1
        %s983 = scalar_lea.sflag [#allocation5], %s982
        %s984 = sand.u32 %s152, 1
        %s985 = smul.addr %s984, 8
        %s986 = scalar_lea.vmem [#allocation4], %s985
        %s987 = sand.u32 %s24, 1
        %s988 = scalar_lea.sflag [#allocation5], %s987
        %s989 = sand.u32 %s178, 1
        %s990 = scalar_lea.vmem [#allocation6], %s989
        // Predicated region
        $region37: #{tpu_custom_call.1} parent=35 // pred_check
          %p991 = pneg %p136
        $region38: #{tpu_custom_call.1} parent=35 // pred_check_branch
          %993 = sbr.rel (%p991) target = $region40
        $region39: #{tpu_custom_call.1} parent=35 // pred_region
          %s995 = ssub.s32 128, 128
          %996 = vsyncadd %s978, %s995
          %s997 = smul.addr %s24, 128
          %s998 = scalar_lea.hbm %s4, %s997
          %s1000 = sshll.u32 %s981, 4
          %s1001 = int_to_ptr.vmem [resolvable:$true] %s1000
          %1003 = dma.vmem_to_hbm [thread:$0]  %s1001, 128, %s998, %s978
        $region40: #{tpu_custom_call.1} parent=35 // pred_fallthru
          _
        // Predicated region
        $region41: #{tpu_custom_call.1} parent=35 // pred_check
          %p1004 = pneg %p162
        $region42: #{tpu_custom_call.1} parent=35 // pred_check_branch
          %1006 = sbr.rel (%p1004) target = $region44
        $region43: #{tpu_custom_call.1} parent=35 // pred_region
          %s1008 = ssub.s32 128, 128
          %1009 = vsyncadd %s983, %s1008
          %s1010 = smul.addr %s24, 128
          %s1011 = scalar_lea.hbm %s5, %s1010
          %s1013 = sshll.u32 %s986, 4
          %s1014 = int_to_ptr.vmem [resolvable:$true] %s1013
          %1016 = dma.vmem_to_hbm [thread:$0]  %s1014, 128, %s1011, %s983
        $region44: #{tpu_custom_call.1} parent=35 // pred_fallthru
          _
        // Predicated region
        $region45: #{tpu_custom_call.1} parent=35 // pred_check
          %p1017 = pneg %p188
        $region46: #{tpu_custom_call.1} parent=35 // pred_check_branch
          %1019 = sbr.rel (%p1017) target = $region48
        $region47: #{tpu_custom_call.1} parent=35 // pred_region
          %s1021 = ssub.s32 16, 16
          %1022 = vsyncadd %s988, %s1021
          %s1023 = smul.addr %s24, 16
          %s1024 = scalar_lea.hbm %s6, %s1023
          %s1026 = sshll.u32 %s990, 4
          %s1027 = int_to_ptr.vmem [resolvable:$true] %s1026
          %1029 = dma.vmem_to_hbm [thread:$0]  %s1027, 16, %s1024, %s988
        $region48: #{tpu_custom_call.1} parent=35 // pred_fallthru
          _
      $region36: #{tpu_custom_call.1} parent=5 // pred_fallthru
        _
      %p1030 = scmp.le.s32.totalorder 2, %s19
      // Predicated region
      $region49: #{tpu_custom_call.1} parent=5 // pred_check
        %p1031 = pneg %p1030
      $region50: #{tpu_custom_call.1} parent=5 // pred_check_branch
        %1033 = sbr.rel (%p1031) target = $region52
      $region51: #{tpu_custom_call.1} parent=5 // pred_region
        %s1034 = ssub.s32 %s19, 2
        // Predicated region
        $region53: #{tpu_custom_call.1} parent=51 // pred_check
          %p1035 = pneg %p142
        $region54: #{tpu_custom_call.1} parent=51 // pred_check_branch
          %1037 = sbr.rel (%p1035) target = $region56
        $region55: #{tpu_custom_call.1} parent=51 // pred_region
          %s1038 = sand.u32 %s127, 1
          %s1039 = scalar_lea.sflag [#allocation3], %s1038
          %s1040 = sand.u32 %s127, 1
          %s1041 = smul.addr %s1040, 8
          %s1042 = scalar_lea.vmem [#allocation2], %s1041
          %1043 = dma.done %s1039, 128
        $region56: #{tpu_custom_call.1} parent=51 // pred_fallthru
          _
        // Predicated region
        $region57: #{tpu_custom_call.1} parent=51 // pred_check
          %p1044 = pneg %p168
        $region58: #{tpu_custom_call.1} parent=51 // pred_check_branch
          %1046 = sbr.rel (%p1044) target = $region60
        $region59: #{tpu_custom_call.1} parent=51 // pred_region
          %s1047 = sand.u32 %s25, 1
          %s1048 = scalar_lea.sflag [#allocation5], %s1047
          %s1049 = sand.u32 %s153, 1
          %s1050 = smul.addr %s1049, 8
          %s1051 = scalar_lea.vmem [#allocation4], %s1050
          %1052 = dma.done %s1048, 128
        $region60: #{tpu_custom_call.1} parent=51 // pred_fallthru
          _
        // Predicated region
        $region61: #{tpu_custom_call.1} parent=51 // pred_check
          %p1053 = pneg %p194
        $region62: #{tpu_custom_call.1} parent=51 // pred_check_branch
          %1055 = sbr.rel (%p1053) target = $region64
        $region63: #{tpu_custom_call.1} parent=51 // pred_region
          %s1056 = sand.u32 %s25, 1
          %s1057 = scalar_lea.sflag [#allocation5], %s1056
          %s1058 = sand.u32 %s179, 1
          %s1059 = scalar_lea.vmem [#allocation6], %s1058
          %1060 = dma.done %s1057, 16
        $region64: #{tpu_custom_call.1} parent=51 // pred_fallthru
          _
      $region52: #{tpu_custom_call.1} parent=5 // pred_fallthru
        _
    $region6: #{tpu_custom_call.1} parent=1 // loop_footer
      %s23 = sadd.s32 1, %s19
    $region7: #{tpu_custom_call.1} parent=1 // loop_footer_branch
      %18 = sbr.rel target = $region3
    $region8: #{tpu_custom_call.1} parent=1 // loop_exit
      _
    %1061 = vsyncpa [#allocation3], 1
    %s1062 = scalar_lea.sflag [#allocation3], 1
    %1063 = vsyncpa %s1062, 1
    %1064 = vsyncpa [#allocation5], 1
    %s1065 = scalar_lea.sflag [#allocation5], 1
    %1066 = vsyncpa %s1065, 1

</llo_original>
